<compile_context>
chip_gen: v5e
topology: v5e:2x2
jax: 0.10.0
libtpu: 0.0.40
codegen_flags: <defaults>
</compile_context>

<pallas_src>
import jax
import jax.numpy as jnp
from jax.experimental import pallas as pl
from jax.experimental.pallas import tpu as pltpu

IMG_DIM = 28 * 28 * 1   # 784
HIDDEN = 128


def _round_up(n, m):
    return ((n + m - 1) // m) * m


def _disc_kernel(x_ref, w1_ref, b1_ref, w2_ref, b2_ref, o_ref):
    """Fused Linear -> LeakyReLU(0.01) -> Linear -> Sigmoid for one batch tile.

    x_ref : (TB, 784) f32  VMEM (tiled over the batch grid)
    w1_ref: (784, 128) bf16 VMEM (resident across grid steps)
    b1_ref: (1, 128)   f32  VMEM (resident)
    w2_ref: (1, 128)   f32  VMEM (resident; second-layer weights as a row)
    b2_ref: (1,)       f32  SMEM (scalar)
    o_ref : (TB, 1)    f32  VMEM (tiled over the batch grid)
    """
    # Layer 1: Linear(784 -> 128). Cast the f32 tile to bf16 on the VPU (hidden
    # under the tile DMA); bf16 x bf16 -> f32 accumulation on the MXU.
    x_bf = x_ref[...].astype(jnp.bfloat16)
    h = jnp.dot(x_bf, w1_ref[...], preferred_element_type=jnp.float32)
    h = h + b1_ref[...]

    # LeakyReLU(0.01) on the VPU (f32).
    h = jnp.where(h > 0, h, 0.01 * h)

    # Layer 2: Linear(128 -> 1). N=1 matmul is degenerate on the MXU, so use a
    # VPU broadcast-multiply + lane reduction (XLU) instead; add scalar bias.
    z = jnp.sum(h * w2_ref[...], axis=-1, keepdims=True) + b2_ref[0]

    # Sigmoid (EUP exp + exact divide; keeps tight numerical match).
    # NOTE: padded rows of a ragged final tile compute garbage here; rows are
    # independent and padded output rows are dropped, so nothing leaks into
    # valid outputs. Do not introduce cross-row reductions.
    o_ref[...] = 1.0 / (1.0 + jnp.exp(-z))


def _choose_tb(B):
    """Aim for ~8 grid steps (pipelining + v7x megacore), tiles >= 256 rows
    (~1 MiB of f32 x), capped at 2048 rows; always a multiple of 8 sublanes."""
    tb = _round_up(pl.cdiv(B, 8), 256)
    tb = max(256, min(tb, 2048))
    return min(tb, _round_up(B, 8))


def discriminator_forward(x, w1, b1, w2, b2, *, tb=None):
    """x: (B, 784) f32. Returns (B, 1) f32 probabilities in [0, 1]."""
    B, F = x.shape
    H = w1.shape[1]

    if tb is None:
        TB = _choose_tb(B)
    else:
        TB = min(_round_up(tb, 8), _round_up(B, 8))
    grid = (pl.cdiv(B, TB),)

    # Small resident params: w1 bf16 (halves its one-time HBM read), rest f32.
    w1_bf = w1.astype(jnp.bfloat16)
    b1_row = b1.reshape(1, H).astype(jnp.float32)
    w2_row = w2.reshape(1, H).astype(jnp.float32)   # (128, 1) -> (1, 128)
    b2_s = b2.reshape(1).astype(jnp.float32)

    cost = pl.CostEstimate(
        flops=2 * B * F * H + 2 * B * H,
        transcendentals=B,
        bytes_accessed=B * F * 4 + F * H * 2 + 2 * H * 4 + 4 + B * 4,
    )

    return pl.pallas_call(
        _disc_kernel,
        out_shape=jax.ShapeDtypeStruct((B, 1), jnp.float32),
        grid=grid,
        in_specs=[
            pl.BlockSpec((TB, F), lambda i: (i, 0)),            # x: f32, tiled over batch
            pl.BlockSpec((F, H), lambda i: (0, 0)),             # w1: bf16, resident
            pl.BlockSpec((1, H), lambda i: (0, 0)),             # b1: resident
            pl.BlockSpec((1, H), lambda i: (0, 0)),             # w2 row: resident
            pl.BlockSpec(memory_space=pltpu.MemorySpace.SMEM),  # b2 scalar in SMEM
        ],
        out_specs=pl.BlockSpec((TB, 1), lambda i: (i, 0)),
        compiler_params=pltpu.CompilerParams(
            dimension_semantics=("parallel",),   # batch tiles shard across v7x's 2 TCs
            vmem_limit_bytes=32 * 1024 * 1024,   # max working set ~13 MiB, fits v5e..v7x
        ),
        cost_estimate=cost,
    )(x, w1_bf, b1_row, w2_row, b2_s)


def init_params(key):
    """Mimics PyTorch nn.Linear default init: U[-1/sqrt(fan_in), +1/sqrt(fan_in)]."""
    k1, k2, k3, k4 = jax.random.split(key, 4)
    bound1 = 1.0 / jnp.sqrt(IMG_DIM)
    bound2 = 1.0 / jnp.sqrt(HIDDEN)
    # Stored as (in, out) so the kernel computes x @ W (PyTorch stores (out, in)).
    w1 = jax.random.uniform(k1, (IMG_DIM, HIDDEN), jnp.float32, -bound1, bound1)
    b1 = jax.random.uniform(k2, (1, HIDDEN), jnp.float32, -bound1, bound1)
    w2 = jax.random.uniform(k3, (HIDDEN, 1), jnp.float32, -bound2, bound2)
    b2 = jax.random.uniform(k4, (1, 1), jnp.float32, -bound2, bound2)
    return w1, b1, w2, b2


def reference_forward_f32(x, w1, b1, w2, b2):
    """Pure-JAX full-f32 reference (module semantics)."""
    h = x @ w1 + b1
    h = jnp.where(h > 0, h, 0.01 * h)
    z = h @ w2 + b2
    return jax.nn.sigmoid(z)


def reference_forward_bf16(x, w1, b1, w2, b2):
    """Pure-JAX reference matching the kernel's precision (bf16 layer-1 inputs, f32 accum)."""
    h = jnp.dot(x.astype(jnp.bfloat16), w1.astype(jnp.bfloat16),
                preferred_element_type=jnp.float32) + b1
    h = jnp.where(h > 0, h, 0.01 * h)
    z = h @ w2 + b2
    return jax.nn.sigmoid(z)


if __name__ == "__main__":
    key = jax.random.PRNGKey(0)
    kx, kp = jax.random.split(key)

    # Small test: B=200 with a 64-row tile exercises multiple grid steps
    # (grid=(4,)), resident weights, and a ragged final tile (200 = 3*64 + 8).
    B = 200
    x = jax.random.normal(kx, (B, IMG_DIM), jnp.float32)
    w1, b1, w2, b2 = init_params(kp)

    out = discriminator_forward(x, w1, b1, w2, b2, tb=64)
    out = jax.block_until_ready(out)
    assert out.shape == (B, 1), out.shape

    # Also run once with the auto-chosen tile (single-step path for small B).
    out_auto = jax.block_until_ready(discriminator_forward(x, w1, b1, w2, b2))
    assert out_auto.shape == (B, 1), out_auto.shape

    # Tight check against a precision-matched reference.
    ref_bf16 = reference_forward_bf16(x, w1, b1, w2, b2)
    assert jnp.allclose(out, ref_bf16, atol=1e-4, rtol=1e-4), (
        float(jnp.max(jnp.abs(out - ref_bf16))))
    assert jnp.allclose(out_auto, ref_bf16, atol=1e-4, rtol=1e-4), (
        float(jnp.max(jnp.abs(out_auto - ref_bf16))))

    # Loose check against the full-f32 module semantics (bf16 layer-1 rounding only).
    ref_f32 = reference_forward_f32(x, w1, b1, w2, b2)
    assert jnp.allclose(out, ref_f32, atol=3e-2, rtol=3e-2), (
        float(jnp.max(jnp.abs(out - ref_f32))))

    print("KERNEL_OK")
</pallas_src>

<mosaic_0001>
module attributes {stable_mosaic.version = 11 : i64} {
  func.func @_disc_kernel(%arg0: i32, %arg1: memref<64x784xf32, #tpu.memory_space<vmem>>, %arg2: memref<784x128xbf16, #tpu.memory_space<vmem>>, %arg3: memref<1x128xf32, #tpu.memory_space<vmem>>, %arg4: memref<1x128xf32, #tpu.memory_space<vmem>>, %arg5: memref<1xf32, #tpu.memory_space<smem>>, %arg6: memref<64x1xf32, #tpu.memory_space<vmem>>) attributes {dimension_semantics = [#tpu.dimension_semantics<parallel>], iteration_bounds = array<i64: 4>, scalar_prefetch = 0 : i64, scratch_operands = 0 : i64, tpu.core_type = #tpu.core_type<tc>, window_params = [{transform_indices = @transform_0, window_bounds = array<i64: 64, 784>}, {pipeline_mode = #tpu.pipeline_mode<synchronous>, transform_indices = @transform_1, window_bounds = array<i64: 784, 128>}, {pipeline_mode = #tpu.pipeline_mode<synchronous>, transform_indices = @transform_2, window_bounds = array<i64: 1, 128>}, {pipeline_mode = #tpu.pipeline_mode<synchronous>, transform_indices = @transform_3, window_bounds = array<i64: 1, 128>}, {transform_indices = @transform_4, window_bounds = array<i64: 1>}, {transform_indices = @transform_5, window_bounds = array<i64: 64, 1>}]} {
    %c0 = arith.constant 0 : index
    %c0_0 = arith.constant 0 : index
    %0 = vector.load %arg1[%c0, %c0_0] : memref<64x784xf32, #tpu.memory_space<vmem>>, vector<64x784xf32>
    %1 = arith.truncf %0 : vector<64x784xf32> to vector<64x784xbf16>
    %c0_1 = arith.constant 0 : index
    %c0_2 = arith.constant 0 : index
    %2 = vector.load %arg2[%c0_1, %c0_2] : memref<784x128xbf16, #tpu.memory_space<vmem>>, vector<784x128xbf16>
    %cst = arith.constant dense<0.000000e+00> : vector<64x128xf32>
    %3 = tpu.matmul %1, %2, %cst {dimension_numbers = #tpu.dot_dimension_numbers<[1], [0], [0], [1], [0, 0, 1, 1], [], []>} : vector<64x784xbf16>, vector<784x128xbf16>, vector<64x128xf32> -> vector<64x128xf32>
    %c0_3 = arith.constant 0 : index
    %c0_4 = arith.constant 0 : index
    %4 = vector.load %arg3[%c0_3, %c0_4] : memref<1x128xf32, #tpu.memory_space<vmem>>, vector<1x128xf32>
    %5 = vector.broadcast %4 : vector<1x128xf32> to vector<64x128xf32>
    %6 = arith.addf %3, %5 : vector<64x128xf32>
    %cst_5 = arith.constant 0.000000e+00 : f32
    %7 = vector.broadcast %cst_5 : f32 to vector<64x128xf32>
    %8 = arith.cmpf ogt, %6, %7 : vector<64x128xf32>
    %cst_6 = arith.constant 0.00999999977 : f32
    %9 = vector.broadcast %cst_6 : f32 to vector<64x128xf32>
    %10 = arith.mulf %9, %6 : vector<64x128xf32>
    %11 = arith.select %8, %6, %10 : vector<64x128xi1>, vector<64x128xf32>
    %c0_7 = arith.constant 0 : index
    %c0_8 = arith.constant 0 : index
    %12 = vector.load %arg4[%c0_7, %c0_8] : memref<1x128xf32, #tpu.memory_space<vmem>>, vector<1x128xf32>
    %13 = vector.broadcast %12 : vector<1x128xf32> to vector<64x128xf32>
    %14 = arith.mulf %11, %13 : vector<64x128xf32>
    %cst_9 = arith.constant dense<0.000000e+00> : vector<64xf32>
    %15 = vector.multi_reduction <add>, %14, %cst_9 [1] : vector<64x128xf32> to vector<64xf32>
    %16 = vector.shape_cast %15 : vector<64xf32> to vector<64x1xf32>
    %c0_10 = arith.constant 0 : index
    %17 = memref.load %arg5[%c0_10] : memref<1xf32, #tpu.memory_space<smem>>
    %18 = vector.broadcast %17 : f32 to vector<64x1xf32>
    %19 = arith.addf %16, %18 : vector<64x1xf32>
    %cst_11 = arith.constant 0.000000e+00 : f32
    %20 = vector.broadcast %cst_11 : f32 to vector<64x1xf32>
    %21 = arith.subf %20, %19 : vector<64x1xf32>
    %22 = math.exp %21 : vector<64x1xf32>
    %cst_12 = arith.constant 1.000000e+00 : f32
    %23 = vector.broadcast %cst_12 : f32 to vector<64x1xf32>
    %24 = arith.addf %23, %22 : vector<64x1xf32>
    %cst_13 = arith.constant 1.000000e+00 : f32
    %25 = vector.broadcast %cst_13 : f32 to vector<64x1xf32>
    %26 = arith.divf %25, %24 : vector<64x1xf32>
    %c0_14 = arith.constant 0 : index
    %c0_15 = arith.constant 0 : index
    %27 = vector.load %arg6[%c0_14, %c0_15] : memref<64x1xf32, #tpu.memory_space<vmem>>, vector<64x1xf32>
    tpu.vector_store %arg6[%c0_14, %c0_15], %26 {strides = array<i32>} : memref<64x1xf32, #tpu.memory_space<vmem>>, vector<64x1xf32>,
    return
  }
  func.func @transform_0(%arg0: i32) -> (i32, i32) {
    %c0_i32 = arith.constant 0 : i32
    %c0_i32_0 = arith.constant 0 : i32
    return %arg0, %c0_i32 : i32, i32
  }
  func.func @transform_1(%arg0: i32) -> (i32, i32) {
    %c0_i32 = arith.constant 0 : i32
    %c0_i32_0 = arith.constant 0 : i32
    %c0_i32_1 = arith.constant 0 : i32
    return %c0_i32, %c0_i32_0 : i32, i32
  }
  func.func @transform_2(%arg0: i32) -> (i32, i32) {
    %c0_i32 = arith.constant 0 : i32
    %c0_i32_0 = arith.constant 0 : i32
    %c0_i32_1 = arith.constant 0 : i32
    return %c0_i32, %c0_i32_0 : i32, i32
  }
  func.func @transform_3(%arg0: i32) -> (i32, i32) {
    %c0_i32 = arith.constant 0 : i32
    %c0_i32_0 = arith.constant 0 : i32
    %c0_i32_1 = arith.constant 0 : i32
    return %c0_i32, %c0_i32_0 : i32, i32
  }
  func.func @transform_4(%arg0: i32) -> i32 {
    %c0_i32 = arith.constant 0 : i32
    %c0_i32_0 = arith.constant 0 : i32
    return %c0_i32 : i32
  }
  func.func @transform_5(%arg0: i32) -> (i32, i32) {
    %c0_i32 = arith.constant 0 : i32
    %c0_i32_0 = arith.constant 0 : i32
    return %arg0, %c0_i32 : i32, i32
  }
}

</mosaic_0001>

<llo_original>
// kernel: tpu_custom_call.1
$region0: #{tpu_custom_call.1}
  #allocation0 [shape = 'u32[]', space=smem, size = 0x4, offset = 0x4, fixed_abs, tag = 'smem constant byte address 0x4 - core index']
  #allocation1 [shape = 'u32[72,128]{1,0:T(1,128)}', space=vmem, size = 0x9000, scoped, tag = 'internal scratch']
  #allocation2 [shape = 'f32[1]{0:T(128)S(6)}', space=smem, size = 0x200, scoped, tag = 'scoped memory for tpu_custom_call.1']
  %s0 = inlined_call_operand.hbm [shape: f32[200,784], index: 0, kind: input, shape index: {}]
  %s1 = inlined_call_operand.hbm [shape: bf16[784,128], index: 1, kind: input, shape index: {}]
  %s2 = inlined_call_operand.vmem [shape: f32[1,128], index: 2, kind: input, shape index: {}]
  %s3 = inlined_call_operand.vmem [shape: f32[1,128], index: 3, kind: input, shape index: {}]
  %s4 = inlined_call_operand.<no memory space> [shape: f32[1], index: 4, kind: input, shape index: {}]
  %s5 = inlined_call_operand.vmem [shape: f32[200,1], index: 5, kind: output, shape index: {}]
  %s6 = sld [smem:[#allocation0]]
  $region109: #{tpu_custom_call.1} parent=0
    _
  %s8 = ssub.s32 1, %s6
  %s9 = scalar_select 0, %s8, %s6
  %10 = sst [smem:[#allocation2]] %s4
  $region1: #{tpu_custom_call.1} parent=0
    #allocation3 [shape = 'u8[458752]{0}', space=vmem, size = 0x70000, scoped, tag = 'input window, operand 0']
    #allocation4 [shape = 's32[2]{0}', space=sflag, size = 0x8, scoped, tag = 'scoped memory for tpu_custom_call.1']
    #allocation5 [shape = 'u8[200704]{0}', space=vmem, size = 0x31000, scoped, tag = 'input window, operand 1, single buffered']
    #allocation6 [shape = 's32[1]{0}', space=sflag, size = 0x4, scoped, tag = 'scoped memory for tpu_custom_call.1']
    #allocation7 [shape = 'u8[65536]{0}', space=vmem, size = 0x10000, scoped, tag = 'output window, operand 0']
    %11 = vsyncpa [#allocation4], 0
    %s12 = scalar_lea.sflag [#allocation4], 1
    %13 = vsyncpa %s12, 0
    %14 = vsyncpa [#allocation6], 0
    loop: start=0, step=1, limit=6
    $region2: #{tpu_custom_call.1} parent=1 // loop_pre_header
      _
    $region3: #{tpu_custom_call.1} parent=1 // loop_header
      %s16 = sphi 0, %s20
      %p17 = scmp.ge.s32.totalorder %s16, 6
      %s26 = sphi 0, %s28
      %s29 = sphi 0, %s26
      %s30 = sphi 0, %s29
      %s46 = sphi 0, %s30
      %s50 = sphi 0, %s50
      %s52 = sphi 0, %s50
      %s53 = sphi 0, %s52
      %s67 = sphi 0, %s53
      %s71 = sphi 0, %s71
      %s73 = sphi 0, %s71
      %s74 = sphi 0, %s73
      %s88 = sphi 0, %s74
      %s92 = sphi 0, %s92
      %s94 = sphi 0, %s92
      %s95 = sphi 0, %s94
      %s109 = sphi 0, %s95
      %s113 = sphi 0, %s113
      %s115 = sphi 0, %s113
      %s116 = sphi 0, %s115
      %s130 = sphi 0, %s116
      %s136 = sphi 0, %s138
      %s139 = sphi 0, %s136
      %s140 = sphi 0, %s139
      %s156 = sphi 0, %s140
    $region4: #{tpu_custom_call.1} parent=1 // loop_header_branch
      %19 = sbr.rel (%p17) target = $region8
    $region5: #{tpu_custom_call.1} parent=1 // loop_body
      %s21 = ssub.s32 %s16, 1
      %s22 = ssub.s32 %s16, 2
      %s23 = sadd.s32 %s16, 1
      %s24 = ssub.s32 %s16, %s23
      %p25 = scmp.eq.s32.totalorder %s24, 0
      %s27 = sadd.s32 %s26, 1
      %s28 = scalar_select %p25, %s26, %s27
      %p31 = pneg %p25
      %p32 = scmp.eq.s32.totalorder %s16, 3
      %p33 = por %p31, %p32
      %p34 = scmp.ne.s32.totalorder %s26, %s29
      %p35 = scmp.eq.s32.totalorder %s16, 0
      %p36 = por %p34, %p35
      %p37 = scmp.ne.s32.totalorder %s26, %s29
      %p38 = scmp.eq.s32.totalorder %s21, 3
      %p39 = por %p37, %p38
      %p40 = scmp.ne.s32.totalorder %s29, %s30
      %p41 = scmp.eq.s32.totalorder %s21, 0
      %p42 = por %p40, %p41
      %p43 = scmp.ne.s32.totalorder %s29, %s30
      %p44 = scmp.eq.s32.totalorder %s22, 3
      %p45 = por %p43, %p44
      %p47 = scmp.ne.s32.totalorder %s30, %s46
      %p48 = scmp.eq.s32.totalorder %s22, 0
      %p49 = por %p47, %p48
      %s51 = sadd.s32 %s50, 1
      %p54 = scmp.eq.s32.totalorder %s16, 3
      %p55 = scmp.ne.s32.totalorder %s50, %s52
      %p56 = scmp.eq.s32.totalorder %s16, 0
      %p57 = por %p55, %p56
      %p58 = scmp.ne.s32.totalorder %s50, %s52
      %p59 = scmp.eq.s32.totalorder %s21, 3
      %p60 = por %p58, %p59
      %p61 = scmp.ne.s32.totalorder %s52, %s53
      %p62 = scmp.eq.s32.totalorder %s21, 0
      %p63 = por %p61, %p62
      %p64 = scmp.ne.s32.totalorder %s52, %s53
      %p65 = scmp.eq.s32.totalorder %s22, 3
      %p66 = por %p64, %p65
      %p68 = scmp.ne.s32.totalorder %s53, %s67
      %p69 = scmp.eq.s32.totalorder %s22, 0
      %p70 = por %p68, %p69
      %s72 = sadd.s32 %s71, 1
      %p75 = scmp.eq.s32.totalorder %s16, 3
      %p76 = scmp.ne.s32.totalorder %s71, %s73
      %p77 = scmp.eq.s32.totalorder %s16, 0
      %p78 = por %p76, %p77
      %p79 = scmp.ne.s32.totalorder %s71, %s73
      %p80 = scmp.eq.s32.totalorder %s21, 3
      %p81 = por %p79, %p80
      %p82 = scmp.ne.s32.totalorder %s73, %s74
      %p83 = scmp.eq.s32.totalorder %s21, 0
      %p84 = por %p82, %p83
      %p85 = scmp.ne.s32.totalorder %s73, %s74
      %p86 = scmp.eq.s32.totalorder %s22, 3
      %p87 = por %p85, %p86
      %p89 = scmp.ne.s32.totalorder %s74, %s88
      %p90 = scmp.eq.s32.totalorder %s22, 0
      %p91 = por %p89, %p90
      %s93 = sadd.s32 %s92, 1
      %p96 = scmp.eq.s32.totalorder %s16, 3
      %p97 = scmp.ne.s32.totalorder %s92, %s94
      %p98 = scmp.eq.s32.totalorder %s16, 0
      %p99 = por %p97, %p98
      %p100 = scmp.ne.s32.totalorder %s92, %s94
      %p101 = scmp.eq.s32.totalorder %s21, 3
      %p102 = por %p100, %p101
      %p103 = scmp.ne.s32.totalorder %s94, %s95
      %p104 = scmp.eq.s32.totalorder %s21, 0
      %p105 = por %p103, %p104
      %p106 = scmp.ne.s32.totalorder %s94, %s95
      %p107 = scmp.eq.s32.totalorder %s22, 3
      %p108 = por %p106, %p107
      %p110 = scmp.ne.s32.totalorder %s95, %s109
      %p111 = scmp.eq.s32.totalorder %s22, 0
      %p112 = por %p110, %p111
      %s114 = sadd.s32 %s113, 1
      %p117 = scmp.eq.s32.totalorder %s16, 3
      %p118 = scmp.ne.s32.totalorder %s113, %s115
      %p119 = scmp.eq.s32.totalorder %s16, 0
      %p120 = por %p118, %p119
      %p121 = scmp.ne.s32.totalorder %s113, %s115
      %p122 = scmp.eq.s32.totalorder %s21, 3
      %p123 = por %p121, %p122
      %p124 = scmp.ne.s32.totalorder %s115, %s116
      %p125 = scmp.eq.s32.totalorder %s21, 0
      %p126 = por %p124, %p125
      %p127 = scmp.ne.s32.totalorder %s115, %s116
      %p128 = scmp.eq.s32.totalorder %s22, 3
      %p129 = por %p127, %p128
      %p131 = scmp.ne.s32.totalorder %s116, %s130
      %p132 = scmp.eq.s32.totalorder %s22, 0
      %p133 = por %p131, %p132
      %s134 = ssub.s32 %s16, %s23
      %p135 = scmp.eq.s32.totalorder %s134, 0
      %s137 = sadd.s32 %s136, 1
      %s138 = scalar_select %p135, %s136, %s137
      %p141 = pneg %p135
      %p142 = scmp.eq.s32.totalorder %s16, 3
      %p143 = por %p141, %p142
      %p144 = scmp.ne.s32.totalorder %s136, %s139
      %p145 = scmp.eq.s32.totalorder %s16, 0
      %p146 = por %p144, %p145
      %p147 = scmp.ne.s32.totalorder %s136, %s139
      %p148 = scmp.eq.s32.totalorder %s21, 3
      %p149 = por %p147, %p148
      %p150 = scmp.ne.s32.totalorder %s139, %s140
      %p151 = scmp.eq.s32.totalorder %s21, 0
      %p152 = por %p150, %p151
      %p153 = scmp.ne.s32.totalorder %s139, %s140
      %p154 = scmp.eq.s32.totalorder %s22, 3
      %p155 = por %p153, %p154
      %p157 = scmp.ne.s32.totalorder %s140, %s156
      %p158 = scmp.eq.s32.totalorder %s22, 0
      %p159 = por %p157, %p158
      %p160 = scmp.le.s32.totalorder 1, %s16
      %p161 = scmp.lt.s32.totalorder %s16, 5
      %p162 = pnand %p160, %p161
      %p163 = pneg %p162
      // Predicated region
      $region9: #{tpu_custom_call.1} parent=5 // pred_check
        _
      $region10: #{tpu_custom_call.1} parent=5 // pred_check_branch
        %165 = sbr.rel (%p162) target = $region12
      $region11: #{tpu_custom_call.1} parent=5 // pred_region
        %s166 = ssub.s32 %s16, 1
        // Predicated region
        $region13: #{tpu_custom_call.1} parent=11 // pred_check
          %p167 = pneg %p63
        $region14: #{tpu_custom_call.1} parent=11 // pred_check_branch
          %169 = sbr.rel (%p167) target = $region16
        $region15: #{tpu_custom_call.1} parent=11 // pred_region
          %171 = vsyncadd [#allocation6], 0
          %s172 = sshll.u32 %s1, 4
          %s173 = int_to_ptr.hbm [resolvable:$true] %s172
          %s174 = sshll.u32 [#allocation5], 4
          %s175 = int_to_ptr.vmem [resolvable:$true] %s174
          %180 = dma.hbm_to_vmem [thread:$0]  %s173, 6272, %s175, [#allocation6], 64, 64, 4
        $region16: #{tpu_custom_call.1} parent=11 // pred_fallthru
          _
        // Predicated region
        $region17: #{tpu_custom_call.1} parent=11 // pred_check
          %p181 = pneg %p84
        $region18: #{tpu_custom_call.1} parent=11 // pred_check_branch
          %183 = sbr.rel (%p181) target = $region20
        $region19: #{tpu_custom_call.1} parent=11 // pred_region
          _
        $region20: #{tpu_custom_call.1} parent=11 // pred_fallthru
          _
        // Predicated region
        $region21: #{tpu_custom_call.1} parent=11 // pred_check
          %p184 = pneg %p105
        $region22: #{tpu_custom_call.1} parent=11 // pred_check_branch
          %186 = sbr.rel (%p184) target = $region24
        $region23: #{tpu_custom_call.1} parent=11 // pred_region
          _
        $region24: #{tpu_custom_call.1} parent=11 // pred_fallthru
          _
        // Predicated region
        $region25: #{tpu_custom_call.1} parent=11 // pred_check
          %p187 = pneg %p126
        $region26: #{tpu_custom_call.1} parent=11 // pred_check_branch
          %189 = sbr.rel (%p187) target = $region28
        $region27: #{tpu_custom_call.1} parent=11 // pred_region
          _
        $region28: #{tpu_custom_call.1} parent=11 // pred_fallthru
          _
      $region12: #{tpu_custom_call.1} parent=5 // pred_fallthru
        _
      %p190 = scmp.lt.s32.totalorder %s16, 4
      // Predicated region
      $region29: #{tpu_custom_call.1} parent=5 // pred_check
        %p191 = pneg %p190
      $region30: #{tpu_custom_call.1} parent=5 // pred_check_branch
        %193 = sbr.rel (%p191) target = $region32
      $region31: #{tpu_custom_call.1} parent=5 // pred_region
        // Predicated region
        $region33: #{tpu_custom_call.1} parent=31 // pred_check
          %p194 = pneg %p36
        $region34: #{tpu_custom_call.1} parent=31 // pred_check_branch
          %196 = sbr.rel (%p194) target = $region36
        $region35: #{tpu_custom_call.1} parent=31 // pred_region
          %s197 = sand.u32 %s26, 1
          %s198 = scalar_lea.sflag [#allocation4], %s197
          %s199 = sand.u32 %s26, 1
          %s200 = smul.addr %s199, 448
          %s201 = scalar_lea.vmem [#allocation3], %s200
          %s202 = smul.u32 8, %s16
          %s203 = ssub.s32 25, %s202
          %p204 = scmp.lt.s32.totalorder %s203, 8
          %s205 = scalar_select %p204, %s203, 8
          %s206 = smul.u32 8, %s205
          %s207 = smul.u32 %s206, 7
          %s208 = ssub.s32 448, %s207
          %s209 = sshll.u32 %s208, 4
          %210 = vsyncadd %s198, %s209
          %p211 = scmp.ne.s32.totalorder 0, %s207
          %s212 = smul.addr %s202, 7
          %s213 = smul.addr %s212, 8
          %s214 = scalar_lea.hbm %s0, %s213
          %s215 = smul.u32 56, %s205
          %s216 = sshll.u32 %s214, 4
          %s217 = int_to_ptr.hbm [resolvable:$true] %s216
          %s218 = sshll.u32 %s201, 4
          %s219 = int_to_ptr.vmem [resolvable:$true] %s218
          %s220 = sshll.u32 %s215, 4
          %224 = dma.hbm_to_vmem [thread:$0]  (%p211), %s217, %s220, %s219, %s198, 896, 896, 56
        $region36: #{tpu_custom_call.1} parent=31 // pred_fallthru
          _
      $region32: #{tpu_custom_call.1} parent=5 // pred_fallthru
        _
      %p225 = scmp.le.s32.totalorder 1, %s16
      %p226 = scmp.lt.s32.totalorder %s16, 5
      %p227 = pnand %p225, %p226
      %p228 = pneg %p227
      // Predicated region
      $region37: #{tpu_custom_call.1} parent=5 // pred_check
        _
      $region38: #{tpu_custom_call.1} parent=5 // pred_check_branch
        %230 = sbr.rel (%p227) target = $region40
      $region39: #{tpu_custom_call.1} parent=5 // pred_region
        %s231 = ssub.s32 %s16, 1
        %s232 = sand.u32 %s29, 1
        %s233 = scalar_lea.sflag [#allocation4], %s232
        %s234 = sand.u32 %s29, 1
        %s235 = smul.addr %s234, 448
        %s236 = scalar_lea.vmem [#allocation3], %s235
        // Predicated region
        $region41: #{tpu_custom_call.1} parent=39 // pred_check
          %p237 = pneg %p42
        $region42: #{tpu_custom_call.1} parent=39 // pred_check_branch
          %239 = sbr.rel (%p237) target = $region44
        $region43: #{tpu_custom_call.1} parent=39 // pred_region
          %241 = dma.done %s233, 7168
        $region44: #{tpu_custom_call.1} parent=39 // pred_fallthru
          _
        // Predicated region
        $region45: #{tpu_custom_call.1} parent=39 // pred_check
          %p242 = pneg %p63
        $region46: #{tpu_custom_call.1} parent=39 // pred_check_branch
          %244 = sbr.rel (%p242) target = $region48
        $region47: #{tpu_custom_call.1} parent=39 // pred_region
          %246 = dma.done [#allocation6], 6272
        $region48: #{tpu_custom_call.1} parent=39 // pred_fallthru
          _
        %s247 = sand.u32 %s29, 1
        %s248 = scalar_lea.sflag [#allocation4], %s247
        %s249 = sand.u32 %s29, 1
        %s250 = smul.addr %s249, 448
        %s251 = scalar_lea.vmem [#allocation3], %s250
        %p252 = pneg %p42
        %p253 = pneg %p39
        %p254 = pneg %p63
        %p255 = pneg %p60
        %p256 = pneg %p84
        %p257 = pneg %p81
        %p258 = pneg %p105
        %p259 = pneg %p102
        %p260 = pneg %p126
        %p261 = pneg %p123
        %p262 = pneg %p152
        %p263 = pneg %p149
        %s264 = sand.u32 %s139, 1
        %s265 = sand.u32 %s139, 1
        %s266 = smul.addr %s265, 64
        %s267 = scalar_lea.vmem [#allocation7], %s266
        %s268 = smul.u32 8, %s21
        %s269 = ssub.s32 25, %s268
        %p270 = scmp.lt.s32.totalorder %s269, 8
        %s271 = scalar_select %p270, %s269, 8
        %s272 = smul.u32 8, %s271
        %s273 = smul.u32 %s272, 7
        %s274 = smul.u32 8, %s21
        %s275 = ssub.s32 25, %s274
        %p276 = scmp.lt.s32.totalorder %s275, 8
        %s277 = scalar_select %p276, %s275, 8
        %s278 = smul.u32 8, %s277
        %v280 = vld [vmem:[%s236] sm:$0xff]
        %v281 = vld [vmem:[%s236 + $0x8] sm:$0xff]
        %v282 = vld [vmem:[%s236 + $0x10] sm:$0xff]
        %v283 = vld [vmem:[%s236 + $0x18] sm:$0xff]
        %v284 = vld [vmem:[%s236 + $0x20] sm:$0xff]
        %v285 = vld [vmem:[%s236 + $0x28] sm:$0xff]
        %v286 = vld [vmem:[%s236 + $0x30] sm:$0xff]
        %v287 = vld [vmem:[%s236 + $0x38] sm:$0xff]
        %v288 = vld [vmem:[%s236 + $0x40] sm:$0xff]
        %v289 = vld [vmem:[%s236 + $0x48] sm:$0xff]
        %v290 = vld [vmem:[%s236 + $0x50] sm:$0xff]
        %v291 = vld [vmem:[%s236 + $0x58] sm:$0xff]
        %v292 = vld [vmem:[%s236 + $0x60] sm:$0xff]
        %v293 = vld [vmem:[%s236 + $0x68] sm:$0xff]
        %v294 = vld [vmem:[%s236 + $0x70] sm:$0xff]
        %v295 = vld [vmem:[%s236 + $0x78] sm:$0xff]
        %v296 = vld [vmem:[%s236 + $0x80] sm:$0xff]
        %v297 = vld [vmem:[%s236 + $0x88] sm:$0xff]
        %v298 = vld [vmem:[%s236 + $0x90] sm:$0xff]
        %v299 = vld [vmem:[%s236 + $0x98] sm:$0xff]
        %v300 = vld [vmem:[%s236 + $0xa0] sm:$0xff]
        %v301 = vld [vmem:[%s236 + $0xa8] sm:$0xff]
        %v302 = vld [vmem:[%s236 + $0xb0] sm:$0xff]
        %v303 = vld [vmem:[%s236 + $0xb8] sm:$0xff]
        %v304 = vld [vmem:[%s236 + $0xc0] sm:$0xff]
        %v305 = vld [vmem:[%s236 + $0xc8] sm:$0xff]
        %v306 = vld [vmem:[%s236 + $0xd0] sm:$0xff]
        %v307 = vld [vmem:[%s236 + $0xd8] sm:$0xff]
        %v308 = vld [vmem:[%s236 + $0xe0] sm:$0xff]
        %v309 = vld [vmem:[%s236 + $0xe8] sm:$0xff]
        %v310 = vld [vmem:[%s236 + $0xf0] sm:$0xff]
        %v311 = vld [vmem:[%s236 + $0xf8] sm:$0xff]
        %v312 = vld [vmem:[%s236 + $0x100] sm:$0xff]
        %v313 = vld [vmem:[%s236 + $0x108] sm:$0xff]
        %v314 = vld [vmem:[%s236 + $0x110] sm:$0xff]
        %v315 = vld [vmem:[%s236 + $0x118] sm:$0xff]
        %v316 = vld [vmem:[%s236 + $0x120] sm:$0xff]
        %v317 = vld [vmem:[%s236 + $0x128] sm:$0xff]
        %v318 = vld [vmem:[%s236 + $0x130] sm:$0xff]
        %v319 = vld [vmem:[%s236 + $0x138] sm:$0xff]
        %v320 = vld [vmem:[%s236 + $0x140] sm:$0xff]
        %v321 = vld [vmem:[%s236 + $0x148] sm:$0xff]
        %v322 = vld [vmem:[%s236 + $0x150] sm:$0xff]
        %v323 = vld [vmem:[%s236 + $0x158] sm:$0xff]
        %v324 = vld [vmem:[%s236 + $0x160] sm:$0xff]
        %v325 = vld [vmem:[%s236 + $0x168] sm:$0xff]
        %v326 = vld [vmem:[%s236 + $0x170] sm:$0xff]
        %v327 = vld [vmem:[%s236 + $0x178] sm:$0xff]
        %v328 = vld [vmem:[%s236 + $0x180] sm:$0xff]
        %v329 = vld [vmem:[%s236 + $0x188] sm:$0xff]
        %v330 = vld [vmem:[%s236 + $0x190] sm:$0xff]
        %v331 = vld [vmem:[%s236 + $0x198] sm:$0xff]
        %v332 = vld [vmem:[%s236 + $0x1a0] sm:$0xff]
        %v333 = vld [vmem:[%s236 + $0x1a8] sm:$0xff]
        %v334 = vld [vmem:[%s236 + $0x1b0] sm:$0xff]
        %v335 = vld [vmem:[%s236 + $0x1b8] sm:$0xff]
        %v336 = vpack.c.bf16 %v287, %v280
        %v337 = vpack.c.bf16 %v288, %v281
        %v338 = vpack.c.bf16 %v289, %v282
        %v339 = vpack.c.bf16 %v290, %v283
        %v340 = vpack.c.bf16 %v291, %v284
        %v341 = vpack.c.bf16 %v292, %v285
        %v342 = vpack.c.bf16 %v293, %v286
        %v343 = vpack.c.bf16 %v301, %v294
        %v344 = vpack.c.bf16 %v302, %v295
        %v345 = vpack.c.bf16 %v303, %v296
        %v346 = vpack.c.bf16 %v304, %v297
        %v347 = vpack.c.bf16 %v305, %v298
        %v348 = vpack.c.bf16 %v306, %v299
        %v349 = vpack.c.bf16 %v307, %v300
        %v350 = vpack.c.bf16 %v315, %v308
        %v351 = vpack.c.bf16 %v316, %v309
        %v352 = vpack.c.bf16 %v317, %v310
        %v353 = vpack.c.bf16 %v318, %v311
        %v354 = vpack.c.bf16 %v319, %v312
        %v355 = vpack.c.bf16 %v320, %v313
        %v356 = vpack.c.bf16 %v321, %v314
        %v357 = vpack.c.bf16 %v329, %v322
        %v358 = vpack.c.bf16 %v330, %v323
        %v359 = vpack.c.bf16 %v331, %v324
        %v360 = vpack.c.bf16 %v332, %v325
        %v361 = vpack.c.bf16 %v333, %v326
        %v362 = vpack.c.bf16 %v334, %v327
        %v363 = vpack.c.bf16 %v335, %v328
        %v364 = vld [vmem:[#allocation5] sm:$0xf]
        %v365 = vld [vmem:[#allocation5 + $0x4] sm:$0xf]
        %v366 = vld [vmem:[#allocation5 + $0x8] sm:$0xf]
        %v367 = vld [vmem:[#allocation5 + $0xc] sm:$0xf]
        %v368 = vld [vmem:[#allocation5 + $0x10] sm:$0xf]
        %v369 = vld [vmem:[#allocation5 + $0x14] sm:$0xf]
        %v370 = vld [vmem:[#allocation5 + $0x18] sm:$0xf]
        %v371 = vld [vmem:[#allocation5 + $0x1c] sm:$0xf]
        %v372 = vld [vmem:[#allocation5 + $0x20] sm:$0xf]
        %v373 = vld [vmem:[#allocation5 + $0x24] sm:$0xf]
        %v374 = vld [vmem:[#allocation5 + $0x28] sm:$0xf]
        %v375 = vld [vmem:[#allocation5 + $0x2c] sm:$0xf]
        %v376 = vld [vmem:[#allocation5 + $0x30] sm:$0xf]
        %v377 = vld [vmem:[#allocation5 + $0x34] sm:$0xf]
        %v378 = vld [vmem:[#allocation5 + $0x38] sm:$0xf]
        %v379 = vld [vmem:[#allocation5 + $0x3c] sm:$0xf]
        %v380 = vld [vmem:[#allocation5 + $0x40] sm:$0xf]
        %v381 = vld [vmem:[#allocation5 + $0x44] sm:$0xf]
        %v382 = vld [vmem:[#allocation5 + $0x48] sm:$0xf]
        %v383 = vld [vmem:[#allocation5 + $0x4c] sm:$0xf]
        %v384 = vld [vmem:[#allocation5 + $0x50] sm:$0xf]
        %v385 = vld [vmem:[#allocation5 + $0x54] sm:$0xf]
        %v386 = vld [vmem:[#allocation5 + $0x58] sm:$0xf]
        %v387 = vld [vmem:[#allocation5 + $0x5c] sm:$0xf]
        %v388 = vld [vmem:[#allocation5 + $0x60] sm:$0xf]
        %v389 = vld [vmem:[#allocation5 + $0x64] sm:$0xf]
        %v390 = vld [vmem:[#allocation5 + $0x68] sm:$0xf]
        %v391 = vld [vmem:[#allocation5 + $0x6c] sm:$0xf]
        %v392 = vld [vmem:[#allocation5 + $0x70] sm:$0xf]
        %v393 = vld [vmem:[#allocation5 + $0x74] sm:$0xf]
        %v394 = vld [vmem:[#allocation5 + $0x78] sm:$0xf]
        %v395 = vld [vmem:[#allocation5 + $0x7c] sm:$0xf]
        %v396 = vld [vmem:[#allocation5 + $0x80] sm:$0xf]
        %v397 = vld [vmem:[#allocation5 + $0x84] sm:$0xf]
        %v398 = vld [vmem:[#allocation5 + $0x88] sm:$0xf]
        %v399 = vld [vmem:[#allocation5 + $0x8c] sm:$0xf]
        %v400 = vld [vmem:[#allocation5 + $0x90] sm:$0xf]
        %v401 = vld [vmem:[#allocation5 + $0x94] sm:$0xf]
        %v402 = vld [vmem:[#allocation5 + $0x98] sm:$0xf]
        %v403 = vld [vmem:[#allocation5 + $0x9c] sm:$0xf]
        %v404 = vld [vmem:[#allocation5 + $0xa0] sm:$0xf]
        %v405 = vld [vmem:[#allocation5 + $0xa4] sm:$0xf]
        %v406 = vld [vmem:[#allocation5 + $0xa8] sm:$0xf]
        %v407 = vld [vmem:[#allocation5 + $0xac] sm:$0xf]
        %v408 = vld [vmem:[#allocation5 + $0xb0] sm:$0xf]
        %v409 = vld [vmem:[#allocation5 + $0xb4] sm:$0xf]
        %v410 = vld [vmem:[#allocation5 + $0xb8] sm:$0xf]
        %v411 = vld [vmem:[#allocation5 + $0xbc] sm:$0xf]
        %v412 = vld [vmem:[#allocation5 + $0xc0] sm:$0xf]
        %v413 = vld [vmem:[#allocation5 + $0xc4] sm:$0xf]
        %v414 = vld [vmem:[#allocation5 + $0xc8] sm:$0xf]
        %v415 = vld [vmem:[#allocation5 + $0xcc] sm:$0xf]
        %v416 = vld [vmem:[#allocation5 + $0xd0] sm:$0xf]
        %v417 = vld [vmem:[#allocation5 + $0xd4] sm:$0xf]
        %v418 = vld [vmem:[#allocation5 + $0xd8] sm:$0xf]
        %v419 = vld [vmem:[#allocation5 + $0xdc] sm:$0xf]
        %v420 = vld [vmem:[#allocation5 + $0xe0] sm:$0xf]
        %v421 = vld [vmem:[#allocation5 + $0xe4] sm:$0xf]
        %v422 = vld [vmem:[#allocation5 + $0xe8] sm:$0xf]
        %v423 = vld [vmem:[#allocation5 + $0xec] sm:$0xf]
        %v424 = vld [vmem:[#allocation5 + $0xf0] sm:$0xf]
        %v425 = vld [vmem:[#allocation5 + $0xf4] sm:$0xf]
        %v426 = vld [vmem:[#allocation5 + $0xf8] sm:$0xf]
        %v427 = vld [vmem:[#allocation5 + $0xfc] sm:$0xf]
        %v428 = vld [vmem:[#allocation5 + $0x100] sm:$0xf]
        %v429 = vld [vmem:[#allocation5 + $0x104] sm:$0xf]
        %v430 = vld [vmem:[#allocation5 + $0x108] sm:$0xf]
        %v431 = vld [vmem:[#allocation5 + $0x10c] sm:$0xf]
        %v432 = vld [vmem:[#allocation5 + $0x110] sm:$0xf]
        %v433 = vld [vmem:[#allocation5 + $0x114] sm:$0xf]
        %v434 = vld [vmem:[#allocation5 + $0x118] sm:$0xf]
        %v435 = vld [vmem:[#allocation5 + $0x11c] sm:$0xf]
        %v436 = vld [vmem:[#allocation5 + $0x120] sm:$0xf]
        %v437 = vld [vmem:[#allocation5 + $0x124] sm:$0xf]
        %v438 = vld [vmem:[#allocation5 + $0x128] sm:$0xf]
        %v439 = vld [vmem:[#allocation5 + $0x12c] sm:$0xf]
        %v440 = vld [vmem:[#allocation5 + $0x130] sm:$0xf]
        %v441 = vld [vmem:[#allocation5 + $0x134] sm:$0xf]
        %v442 = vld [vmem:[#allocation5 + $0x138] sm:$0xf]
        %v443 = vld [vmem:[#allocation5 + $0x13c] sm:$0xf]
        %v444 = vld [vmem:[#allocation5 + $0x140] sm:$0xf]
        %v445 = vld [vmem:[#allocation5 + $0x144] sm:$0xf]
        %v446 = vld [vmem:[#allocation5 + $0x148] sm:$0xf]
        %v447 = vld [vmem:[#allocation5 + $0x14c] sm:$0xf]
        %v448 = vld [vmem:[#allocation5 + $0x150] sm:$0xf]
        %v449 = vld [vmem:[#allocation5 + $0x154] sm:$0xf]
        %v450 = vld [vmem:[#allocation5 + $0x158] sm:$0xf]
        %v451 = vld [vmem:[#allocation5 + $0x15c] sm:$0xf]
        %v452 = vld [vmem:[#allocation5 + $0x160] sm:$0xf]
        %v453 = vld [vmem:[#allocation5 + $0x164] sm:$0xf]
        %v454 = vld [vmem:[#allocation5 + $0x168] sm:$0xf]
        %v455 = vld [vmem:[#allocation5 + $0x16c] sm:$0xf]
        %v456 = vld [vmem:[#allocation5 + $0x170] sm:$0xf]
        %v457 = vld [vmem:[#allocation5 + $0x174] sm:$0xf]
        %v458 = vld [vmem:[#allocation5 + $0x178] sm:$0xf]
        %v459 = vld [vmem:[#allocation5 + $0x17c] sm:$0xf]
        %v460 = vld [vmem:[#allocation5 + $0x180] sm:$0xf]
        %v461 = vld [vmem:[#allocation5 + $0x184] sm:$0xf]
        %v462 = vld [vmem:[%s2] sm:$0x1]
        %v464 = vperm.slane %v462, 0
        %v564 = vunpack.c.l.b16 %v364
        %v565 = vunpack.c.l.b16 %v365
        %v566 = vunpack.c.l.b16 %v366
        %v567 = vunpack.c.l.b16 %v367
        %v568 = vunpack.c.l.b16 %v368
        %v569 = vunpack.c.l.b16 %v369
        %v570 = vunpack.c.l.b16 %v370
        %v571 = vunpack.c.l.b16 %v371
        %v572 = vunpack.c.l.b16 %v372
        %v573 = vunpack.c.l.b16 %v373
        %v574 = vunpack.c.l.b16 %v374
        %v575 = vunpack.c.l.b16 %v375
        %v576 = vunpack.c.l.b16 %v376
        %v577 = vunpack.c.l.b16 %v377
        %v578 = vunpack.c.l.b16 %v378
        %v579 = vunpack.c.l.b16 %v379
        %v580 = vunpack.c.l.b16 %v380
        %v581 = vunpack.c.l.b16 %v381
        %v582 = vunpack.c.l.b16 %v382
        %v583 = vunpack.c.l.b16 %v383
        %v584 = vunpack.c.l.b16 %v384
        %v585 = vunpack.c.l.b16 %v385
        %v586 = vunpack.c.l.b16 %v386
        %v587 = vunpack.c.l.b16 %v387
        %v588 = vunpack.c.l.b16 %v388
        %v589 = vunpack.c.l.b16 %v389
        %v590 = vunpack.c.l.b16 %v390
        %v591 = vunpack.c.l.b16 %v391
        %v592 = vunpack.c.l.b16 %v392
        %v593 = vunpack.c.l.b16 %v393
        %v594 = vunpack.c.l.b16 %v394
        %v595 = vunpack.c.l.b16 %v395
        %v596 = vunpack.c.l.b16 %v396
        %v597 = vunpack.c.l.b16 %v397
        %v598 = vunpack.c.l.b16 %v398
        %v599 = vunpack.c.l.b16 %v399
        %v600 = vunpack.c.l.b16 %v400
        %v601 = vunpack.c.l.b16 %v401
        %v602 = vunpack.c.l.b16 %v402
        %v603 = vunpack.c.l.b16 %v403
        %v604 = vunpack.c.l.b16 %v404
        %v605 = vunpack.c.l.b16 %v405
        %v606 = vunpack.c.l.b16 %v406
        %v607 = vunpack.c.l.b16 %v407
        %v608 = vunpack.c.l.b16 %v408
        %v609 = vunpack.c.l.b16 %v409
        %v610 = vunpack.c.l.b16 %v410
        %v611 = vunpack.c.l.b16 %v411
        %v612 = vunpack.c.l.b16 %v412
        %v613 = vunpack.c.l.b16 %v413
        %v614 = vunpack.c.l.b16 %v414
        %v615 = vunpack.c.l.b16 %v415
        %v616 = vunpack.c.l.b16 %v416
        %v617 = vunpack.c.l.b16 %v417
        %v618 = vunpack.c.l.b16 %v418
        %v619 = vunpack.c.l.b16 %v419
        %v620 = vunpack.c.l.b16 %v420
        %v621 = vunpack.c.l.b16 %v421
        %v622 = vunpack.c.l.b16 %v422
        %v623 = vunpack.c.l.b16 %v423
        %v624 = vunpack.c.l.b16 %v424
        %v625 = vunpack.c.l.b16 %v425
        %v626 = vunpack.c.l.b16 %v426
        %v627 = vunpack.c.l.b16 %v427
        %v628 = vunpack.c.l.b16 %v428
        %v629 = vunpack.c.l.b16 %v429
        %v630 = vunpack.c.l.b16 %v430
        %v631 = vunpack.c.l.b16 %v431
        %v632 = vunpack.c.l.b16 %v432
        %v633 = vunpack.c.l.b16 %v433
        %v634 = vunpack.c.l.b16 %v434
        %v635 = vunpack.c.l.b16 %v435
        %v636 = vunpack.c.l.b16 %v436
        %v637 = vunpack.c.l.b16 %v437
        %v638 = vunpack.c.l.b16 %v438
        %v639 = vunpack.c.l.b16 %v439
        %v640 = vunpack.c.l.b16 %v440
        %v641 = vunpack.c.l.b16 %v441
        %v642 = vunpack.c.l.b16 %v442
        %v643 = vunpack.c.l.b16 %v443
        %v644 = vunpack.c.l.b16 %v444
        %v645 = vunpack.c.l.b16 %v445
        %v646 = vunpack.c.l.b16 %v446
        %v647 = vunpack.c.l.b16 %v447
        %v648 = vunpack.c.l.b16 %v448
        %v649 = vunpack.c.l.b16 %v449
        %v650 = vunpack.c.l.b16 %v450
        %v651 = vunpack.c.l.b16 %v451
        %v652 = vunpack.c.l.b16 %v452
        %v653 = vunpack.c.l.b16 %v453
        %v654 = vunpack.c.l.b16 %v454
        %v655 = vunpack.c.l.b16 %v455
        %v656 = vunpack.c.l.b16 %v456
        %v657 = vunpack.c.l.b16 %v457
        %v658 = vunpack.c.l.b16 %v458
        %v659 = vunpack.c.l.b16 %v459
        %v660 = vunpack.c.l.b16 %v460
        %v661 = vunpack.c.l.b16 %v461
        %v662 = vpack.c.b16 %v565, %v564
        %v663 = vpack.c.b16 %v567, %v566
        %v664 = vpack.c.b16 %v569, %v568
        %v665 = vpack.c.b16 %v571, %v570
        %v666 = vpack.c.b16 %v573, %v572
        %v667 = vpack.c.b16 %v575, %v574
        %v668 = vpack.c.b16 %v577, %v576
        %v669 = vpack.c.b16 %v579, %v578
        %v670 = vpack.c.b16 %v581, %v580
        %v671 = vpack.c.b16 %v583, %v582
        %v672 = vpack.c.b16 %v585, %v584
        %v673 = vpack.c.b16 %v587, %v586
        %v674 = vpack.c.b16 %v589, %v588
        %v675 = vpack.c.b16 %v591, %v590
        %v676 = vpack.c.b16 %v593, %v592
        %v677 = vpack.c.b16 %v595, %v594
        %v678 = vpack.c.b16 %v597, %v596
        %v679 = vpack.c.b16 %v599, %v598
        %v680 = vpack.c.b16 %v601, %v600
        %v681 = vpack.c.b16 %v603, %v602
        %v682 = vpack.c.b16 %v605, %v604
        %v683 = vpack.c.b16 %v607, %v606
        %v684 = vpack.c.b16 %v609, %v608
        %v685 = vpack.c.b16 %v611, %v610
        %v686 = vpack.c.b16 %v613, %v612
        %v687 = vpack.c.b16 %v615, %v614
        %v688 = vpack.c.b16 %v617, %v616
        %v689 = vpack.c.b16 %v619, %v618
        %v690 = vpack.c.b16 %v621, %v620
        %v691 = vpack.c.b16 %v623, %v622
        %v692 = vpack.c.b16 %v625, %v624
        %v693 = vpack.c.b16 %v627, %v626
        %v694 = vpack.c.b16 %v629, %v628
        %v695 = vpack.c.b16 %v631, %v630
        %v696 = vpack.c.b16 %v633, %v632
        %v697 = vpack.c.b16 %v635, %v634
        %v698 = vpack.c.b16 %v637, %v636
        %v699 = vpack.c.b16 %v639, %v638
        %v700 = vpack.c.b16 %v641, %v640
        %v701 = vpack.c.b16 %v643, %v642
        %v702 = vpack.c.b16 %v645, %v644
        %v703 = vpack.c.b16 %v647, %v646
        %v704 = vpack.c.b16 %v649, %v648
        %v705 = vpack.c.b16 %v651, %v650
        %v706 = vpack.c.b16 %v653, %v652
        %v707 = vpack.c.b16 %v655, %v654
        %v708 = vpack.c.b16 %v657, %v656
        %v709 = vpack.c.b16 %v659, %v658
        %v710 = vpack.c.b16 %v661, %v660
        %vm760 = vcmask 130048
        %v762 = vsel %vm760, %v342, 0
        %v765 = vsel %vm760, %v349, 0
        %v768 = vsel %vm760, %v356, 0
        %v771 = vsel %vm760, %v363, 0
        %773 = vmatpush.bf16.msra.mxu0 %v669
        %774 = vmatpush.bf16.msra.mxu0 %v668
        %775 = vmatpush.bf16.msra.mxu0 %v667
        %776 = vmatpush.bf16.msra.mxu0 %v666
        %777 = vmatpush.bf16.msra.mxu0 %v665
        %778 = vmatpush.bf16.msra.mxu0 %v664
        %779 = vmatpush.bf16.msra.mxu0 %v663
        %780 = vmatpush.bf16.msra.mxu0 %v662
        %781 = vmatmul.bf16.gmra.mxu0 %v336
        %v782 = vpop.f32.mrf.mxu0
        %v783 = vadd.f32 %v464, %v782
        %v784 = vpop.f32.mrf.mxu0
        %v785 = vadd.f32 %v464, %v784
        %786 = vmatmul.bf16.gmra.mxu0 %v343
        %v787 = vpop.f32.mrf.mxu0
        %v788 = vadd.f32 %v464, %v787
        %v789 = vpop.f32.mrf.mxu0
        %v790 = vadd.f32 %v464, %v789
        %791 = vmatmul.bf16.gmra.mxu0 %v350
        %v792 = vpop.f32.mrf.mxu0
        %v793 = vadd.f32 %v464, %v792
        %v794 = vpop.f32.mrf.mxu0
        %v795 = vadd.f32 %v464, %v794
        %796 = vmatmul.bf16.gmra.mxu0 %v357
        %v797 = vpop.f32.mrf.mxu0
        %v798 = vadd.f32 %v464, %v797
        %v799 = vpop.f32.mrf.mxu0
        %v800 = vadd.f32 %v464, %v799
        %801 = vdwg.mxu0
        %802 = vmatpush.bf16.msra.mxu0 %v677
        %803 = vmatpush.bf16.msra.mxu0 %v676
        %804 = vmatpush.bf16.msra.mxu0 %v675
        %805 = vmatpush.bf16.msra.mxu0 %v674
        %806 = vmatpush.bf16.msra.mxu0 %v673
        %807 = vmatpush.bf16.msra.mxu0 %v672
        %808 = vmatpush.bf16.msra.mxu0 %v671
        %809 = vmatpush.bf16.msra.mxu0 %v670
        %810 = vmatmul.bf16.gmra.mxu0 %v337
        %v811 = vpop.f32.mrf.mxu0
        %v812 = vadd.f32 %v783, %v811
        %v813 = vpop.f32.mrf.mxu0
        %v814 = vadd.f32 %v785, %v813
        %815 = vmatmul.bf16.gmra.mxu0 %v344
        %v816 = vpop.f32.mrf.mxu0
        %v817 = vadd.f32 %v788, %v816
        %v818 = vpop.f32.mrf.mxu0
        %v819 = vadd.f32 %v790, %v818
        %820 = vmatmul.bf16.gmra.mxu0 %v351
        %v821 = vpop.f32.mrf.mxu0
        %v822 = vadd.f32 %v793, %v821
        %v823 = vpop.f32.mrf.mxu0
        %v824 = vadd.f32 %v795, %v823
        %825 = vmatmul.bf16.gmra.mxu0 %v358
        %v826 = vpop.f32.mrf.mxu0
        %v827 = vadd.f32 %v798, %v826
        %v828 = vpop.f32.mrf.mxu0
        %v829 = vadd.f32 %v800, %v828
        %830 = vdwg.mxu0
        %831 = vmatpush.bf16.msra.mxu0 %v685
        %832 = vmatpush.bf16.msra.mxu0 %v684
        %833 = vmatpush.bf16.msra.mxu0 %v683
        %834 = vmatpush.bf16.msra.mxu0 %v682
        %835 = vmatpush.bf16.msra.mxu0 %v681
        %836 = vmatpush.bf16.msra.mxu0 %v680
        %837 = vmatpush.bf16.msra.mxu0 %v679
        %838 = vmatpush.bf16.msra.mxu0 %v678
        %839 = vmatmul.bf16.gmra.mxu0 %v338
        %v840 = vpop.f32.mrf.mxu0
        %v841 = vadd.f32 %v812, %v840
        %v842 = vpop.f32.mrf.mxu0
        %v843 = vadd.f32 %v814, %v842
        %844 = vmatmul.bf16.gmra.mxu0 %v345
        %v845 = vpop.f32.mrf.mxu0
        %v846 = vadd.f32 %v817, %v845
        %v847 = vpop.f32.mrf.mxu0
        %v848 = vadd.f32 %v819, %v847
        %849 = vmatmul.bf16.gmra.mxu0 %v352
        %v850 = vpop.f32.mrf.mxu0
        %v851 = vadd.f32 %v822, %v850
        %v852 = vpop.f32.mrf.mxu0
        %v853 = vadd.f32 %v824, %v852
        %854 = vmatmul.bf16.gmra.mxu0 %v359
        %v855 = vpop.f32.mrf.mxu0
        %v856 = vadd.f32 %v827, %v855
        %v857 = vpop.f32.mrf.mxu0
        %v858 = vadd.f32 %v829, %v857
        %859 = vdwg.mxu0
        %860 = vmatpush.bf16.msra.mxu0 %v693
        %861 = vmatpush.bf16.msra.mxu0 %v692
        %862 = vmatpush.bf16.msra.mxu0 %v691
        %863 = vmatpush.bf16.msra.mxu0 %v690
        %864 = vmatpush.bf16.msra.mxu0 %v689
        %865 = vmatpush.bf16.msra.mxu0 %v688
        %866 = vmatpush.bf16.msra.mxu0 %v687
        %867 = vmatpush.bf16.msra.mxu0 %v686
        %868 = vmatmul.bf16.gmra.mxu0 %v339
        %v869 = vpop.f32.mrf.mxu0
        %v870 = vadd.f32 %v841, %v869
        %v871 = vpop.f32.mrf.mxu0
        %v872 = vadd.f32 %v843, %v871
        %873 = vmatmul.bf16.gmra.mxu0 %v346
        %v874 = vpop.f32.mrf.mxu0
        %v875 = vadd.f32 %v846, %v874
        %v876 = vpop.f32.mrf.mxu0
        %v877 = vadd.f32 %v848, %v876
        %878 = vmatmul.bf16.gmra.mxu0 %v353
        %v879 = vpop.f32.mrf.mxu0
        %v880 = vadd.f32 %v851, %v879
        %v881 = vpop.f32.mrf.mxu0
        %v882 = vadd.f32 %v853, %v881
        %883 = vmatmul.bf16.gmra.mxu0 %v360
        %v884 = vpop.f32.mrf.mxu0
        %v885 = vadd.f32 %v856, %v884
        %v886 = vpop.f32.mrf.mxu0
        %v887 = vadd.f32 %v858, %v886
        %888 = vdwg.mxu0
        %889 = vmatpush.bf16.msra.mxu0 %v701
        %890 = vmatpush.bf16.msra.mxu0 %v700
        %891 = vmatpush.bf16.msra.mxu0 %v699
        %892 = vmatpush.bf16.msra.mxu0 %v698
        %893 = vmatpush.bf16.msra.mxu0 %v697
        %894 = vmatpush.bf16.msra.mxu0 %v696
        %895 = vmatpush.bf16.msra.mxu0 %v695
        %896 = vmatpush.bf16.msra.mxu0 %v694
        %897 = vmatmul.bf16.gmra.mxu0 %v340
        %v898 = vpop.f32.mrf.mxu0
        %v899 = vadd.f32 %v870, %v898
        %v900 = vpop.f32.mrf.mxu0
        %v901 = vadd.f32 %v872, %v900
        %902 = vmatmul.bf16.gmra.mxu0 %v347
        %v903 = vpop.f32.mrf.mxu0
        %v904 = vadd.f32 %v875, %v903
        %v905 = vpop.f32.mrf.mxu0
        %v906 = vadd.f32 %v877, %v905
        %907 = vmatmul.bf16.gmra.mxu0 %v354
        %v908 = vpop.f32.mrf.mxu0
        %v909 = vadd.f32 %v880, %v908
        %v910 = vpop.f32.mrf.mxu0
        %v911 = vadd.f32 %v882, %v910
        %912 = vmatmul.bf16.gmra.mxu0 %v361
        %v913 = vpop.f32.mrf.mxu0
        %v914 = vadd.f32 %v885, %v913
        %v915 = vpop.f32.mrf.mxu0
        %v916 = vadd.f32 %v887, %v915
        %917 = vdwg.mxu0
        %918 = vmatpush.bf16.msra.mxu0 %v709
        %919 = vmatpush.bf16.msra.mxu0 %v708
        %920 = vmatpush.bf16.msra.mxu0 %v707
        %921 = vmatpush.bf16.msra.mxu0 %v706
        %922 = vmatpush.bf16.msra.mxu0 %v705
        %923 = vmatpush.bf16.msra.mxu0 %v704
        %924 = vmatpush.bf16.msra.mxu0 %v703
        %925 = vmatpush.bf16.msra.mxu0 %v702
        %926 = vmatmul.bf16.gmra.mxu0 %v341
        %v927 = vpop.f32.mrf.mxu0
        %v928 = vadd.f32 %v899, %v927
        %v929 = vpop.f32.mrf.mxu0
        %v930 = vadd.f32 %v901, %v929
        %931 = vmatmul.bf16.gmra.mxu0 %v348
        %v932 = vpop.f32.mrf.mxu0
        %v933 = vadd.f32 %v904, %v932
        %v934 = vpop.f32.mrf.mxu0
        %v935 = vadd.f32 %v906, %v934
        %936 = vmatmul.bf16.gmra.mxu0 %v355
        %v937 = vpop.f32.mrf.mxu0
        %v938 = vadd.f32 %v909, %v937
        %v939 = vpop.f32.mrf.mxu0
        %v940 = vadd.f32 %v911, %v939
        %941 = vmatmul.bf16.gmra.mxu0 %v362
        %v942 = vpop.f32.mrf.mxu0
        %v943 = vadd.f32 %v914, %v942
        %v944 = vpop.f32.mrf.mxu0
        %v945 = vadd.f32 %v916, %v944
        %946 = vdwg.mxu0
        %947 = vmatpush.bf16.msra.mxu0 0
        %948 = vmatpush.bf16.msra.mxu0 0
        %949 = vmatpush.bf16.msra.mxu0 0
        %950 = vmatpush.bf16.msra.mxu0 0
        %951 = vmatpush.bf16.msra.mxu0 0
        %952 = vmatpush.bf16.msra.mxu0 0
        %953 = vmatpush.bf16.msra.mxu0 0
        %954 = vmatpush.bf16.msra.mxu0 %v710
        %955 = vmatmul.bf16.gmra.mxu0 %v762
        %v956 = vpop.f32.mrf.mxu0
        %v957 = vadd.f32 %v928, %v956
        %v958 = vpop.f32.mrf.mxu0
        %v959 = vadd.f32 %v930, %v958
        %960 = vmatmul.bf16.gmra.mxu0 %v765
        %v961 = vpop.f32.mrf.mxu0
        %v962 = vadd.f32 %v933, %v961
        %v963 = vpop.f32.mrf.mxu0
        %v964 = vadd.f32 %v935, %v963
        %965 = vmatmul.bf16.gmra.mxu0 %v768
        %v966 = vpop.f32.mrf.mxu0
        %v967 = vadd.f32 %v938, %v966
        %v968 = vpop.f32.mrf.mxu0
        %v969 = vadd.f32 %v940, %v968
        %970 = vmatmul.bf16.gmra.mxu0 %v771
        %v971 = vpop.f32.mrf.mxu0
        %v972 = vadd.f32 %v943, %v971
        %v973 = vpop.f32.mrf.mxu0
        %v974 = vadd.f32 %v945, %v973
        %975 = vdwg.mxu0
        %vm976 = vcmp.gt.f32.partialorder %v957, 0.0
        %vm977 = vcmp.gt.f32.partialorder %v959, 0.0
        %vm978 = vcmp.gt.f32.partialorder %v962, 0.0
        %vm979 = vcmp.gt.f32.partialorder %v964, 0.0
        %vm980 = vcmp.gt.f32.partialorder %v967, 0.0
        %vm981 = vcmp.gt.f32.partialorder %v969, 0.0
        %vm982 = vcmp.gt.f32.partialorder %v972, 0.0
        %vm983 = vcmp.gt.f32.partialorder %v974, 0.0
        %v984 = vmul.f32 %v957, 0.01
        %v985 = vmul.f32 %v959, 0.01
        %v986 = vmul.f32 %v962, 0.01
        %v987 = vmul.f32 %v964, 0.01
        %v988 = vmul.f32 %v967, 0.01
        %v989 = vmul.f32 %v969, 0.01
        %v990 = vmul.f32 %v972, 0.01
        %v991 = vmul.f32 %v974, 0.01
        %v992 = vsel %vm976, %v957, %v984
        %v993 = vsel %vm977, %v959, %v985
        %v994 = vsel %vm978, %v962, %v986
        %v995 = vsel %vm979, %v964, %v987
        %v996 = vsel %vm980, %v967, %v988
        %v997 = vsel %vm981, %v969, %v989
        %v998 = vsel %vm982, %v972, %v990
        %v999 = vsel %vm983, %v974, %v991
        %v1000 = vld [vmem:[%s3] sm:$0x1]
        %v1002 = vperm.slane %v1000, 0
        %v1004 = vmul.f32 %v992, %v1002
        %v1005 = vmul.f32 %v993, %v1002
        %v1006 = vmul.f32 %v994, %v1002
        %v1007 = vmul.f32 %v995, %v1002
        %v1008 = vmul.f32 %v996, %v1002
        %v1009 = vmul.f32 %v997, %v1002
        %v1010 = vmul.f32 %v998, %v1002
        %v1011 = vmul.f32 %v999, %v1002
        %1012 = vadd.xlane.f32.xlu0 %v1004
        %v1013 = vpop.xlane.xlu0 %1012
        %1014 = vadd.xlane.f32.xlu0 %v1005
        %v1015 = vpop.xlane.xlu0 %1014
        %1016 = vadd.xlane.f32.xlu0 %v1006
        %v1017 = vpop.xlane.xlu0 %1016
        %1018 = vadd.xlane.f32.xlu0 %v1007
        %v1019 = vpop.xlane.xlu0 %1018
        %1020 = vadd.xlane.f32.xlu0 %v1008
        %v1021 = vpop.xlane.xlu0 %1020
        %1022 = vadd.xlane.f32.xlu0 %v1009
        %v1023 = vpop.xlane.xlu0 %1022
        %1024 = vadd.xlane.f32.xlu0 %v1010
        %v1025 = vpop.xlane.xlu0 %1024
        %1026 = vadd.xlane.f32.xlu0 %v1011
        %v1027 = vpop.xlane.xlu0 %1026
        %s1028 = sld [smem:[#allocation2]]
        %v1029 = vstv %s1028
        %v1030 = vadd.f32 %v1013, %v1029
        %v1031 = vadd.f32 %v1015, %v1029
        %v1032 = vadd.f32 %v1017, %v1029
        %v1033 = vadd.f32 %v1019, %v1029
        %v1034 = vadd.f32 %v1021, %v1029
        %v1035 = vadd.f32 %v1023, %v1029
        %v1036 = vadd.f32 %v1025, %v1029
        %v1037 = vadd.f32 %v1027, %v1029
        %v1038 = vsub.f32 0.0, %v1030
        %v1039 = vsub.f32 0.0, %v1031
        %v1040 = vsub.f32 0.0, %v1032
        %v1041 = vsub.f32 0.0, %v1033
        %v1042 = vsub.f32 0.0, %v1034
        %v1043 = vsub.f32 0.0, %v1035
        %v1044 = vsub.f32 0.0, %v1036
        %v1045 = vsub.f32 0.0, %v1037
        %v1046 = vmul.f32 %v1038, 1.442695
        %v1047 = vpow.pop %v1046
        %v1048 = vmul.f32 %v1039, 1.442695
        %v1049 = vpow.pop %v1048
        %v1050 = vmul.f32 %v1040, 1.442695
        %v1051 = vpow.pop %v1050
        %v1052 = vmul.f32 %v1041, 1.442695
        %v1053 = vpow.pop %v1052
        %v1054 = vmul.f32 %v1042, 1.442695
        %v1055 = vpow.pop %v1054
        %v1056 = vmul.f32 %v1043, 1.442695
        %v1057 = vpow.pop %v1056
        %v1058 = vmul.f32 %v1044, 1.442695
        %v1059 = vpow.pop %v1058
        %v1060 = vmul.f32 %v1045, 1.442695
        %v1061 = vpow.pop %v1060
        %v1062 = vadd.f32 %v1047, 1.0
        %v1063 = vadd.f32 %v1049, 1.0
        %v1064 = vadd.f32 %v1051, 1.0
        %v1065 = vadd.f32 %v1053, 1.0
        %v1066 = vadd.f32 %v1055, 1.0
        %v1067 = vadd.f32 %v1057, 1.0
        %v1068 = vadd.f32 %v1059, 1.0
        %v1069 = vadd.f32 %v1061, 1.0
        %v1070 = vrcp.pop %v1062
        %v1071 = vmul.f32 %v1062, %v1070
        %v1072 = vsub.f32 1.0, %v1071
        %v1073 = vmul.f32 %v1070, %v1072
        %v1074 = vadd.f32 %v1070, %v1073
        %vm1075 = vweird.f32 %v1062
        %vm1076 = vweird.f32 %v1070
        %vm1077 = vmor %vm1075, %vm1076
        %v1078 = vsel %vm1077, %v1070, %v1074
        %v1079 = vand.u32 2147483647, %v1062
        %vm1080 = vcmp.eq.f32.partialorder %v1079, 8.507059e+37
        %v1081 = vand.u32 %v1062, 2147483648
        %v1082 = vor.u32 1.1754944e-38, %v1081
        %v1083 = vsel %vm1080, %v1082, %v1078
        %v1084 = vmul.f32 1.0, %v1083
        %v1085 = vrcp.pop %v1063
        %v1086 = vmul.f32 %v1063, %v1085
        %v1087 = vsub.f32 1.0, %v1086
        %v1088 = vmul.f32 %v1085, %v1087
        %v1089 = vadd.f32 %v1085, %v1088
        %vm1090 = vweird.f32 %v1063
        %vm1091 = vweird.f32 %v1085
        %vm1092 = vmor %vm1090, %vm1091
        %v1093 = vsel %vm1092, %v1085, %v1089
        %v1094 = vand.u32 2147483647, %v1063
        %vm1095 = vcmp.eq.f32.partialorder %v1094, 8.507059e+37
        %v1096 = vand.u32 %v1063, 2147483648
        %v1097 = vor.u32 1.1754944e-38, %v1096
        %v1098 = vsel %vm1095, %v1097, %v1093
        %v1099 = vmul.f32 1.0, %v1098
        %v1100 = vrcp.pop %v1064
        %v1101 = vmul.f32 %v1064, %v1100
        %v1102 = vsub.f32 1.0, %v1101
        %v1103 = vmul.f32 %v1100, %v1102
        %v1104 = vadd.f32 %v1100, %v1103
        %vm1105 = vweird.f32 %v1064
        %vm1106 = vweird.f32 %v1100
        %vm1107 = vmor %vm1105, %vm1106
        %v1108 = vsel %vm1107, %v1100, %v1104
        %v1109 = vand.u32 2147483647, %v1064
        %vm1110 = vcmp.eq.f32.partialorder %v1109, 8.507059e+37
        %v1111 = vand.u32 %v1064, 2147483648
        %v1112 = vor.u32 1.1754944e-38, %v1111
        %v1113 = vsel %vm1110, %v1112, %v1108
        %v1114 = vmul.f32 1.0, %v1113
        %v1115 = vrcp.pop %v1065
        %v1116 = vmul.f32 %v1065, %v1115
        %v1117 = vsub.f32 1.0, %v1116
        %v1118 = vmul.f32 %v1115, %v1117
        %v1119 = vadd.f32 %v1115, %v1118
        %vm1120 = vweird.f32 %v1065
        %vm1121 = vweird.f32 %v1115
        %vm1122 = vmor %vm1120, %vm1121
        %v1123 = vsel %vm1122, %v1115, %v1119
        %v1124 = vand.u32 2147483647, %v1065
        %vm1125 = vcmp.eq.f32.partialorder %v1124, 8.507059e+37
        %v1126 = vand.u32 %v1065, 2147483648
        %v1127 = vor.u32 1.1754944e-38, %v1126
        %v1128 = vsel %vm1125, %v1127, %v1123
        %v1129 = vmul.f32 1.0, %v1128
        %v1130 = vrcp.pop %v1066
        %v1131 = vmul.f32 %v1066, %v1130
        %v1132 = vsub.f32 1.0, %v1131
        %v1133 = vmul.f32 %v1130, %v1132
        %v1134 = vadd.f32 %v1130, %v1133
        %vm1135 = vweird.f32 %v1066
        %vm1136 = vweird.f32 %v1130
        %vm1137 = vmor %vm1135, %vm1136
        %v1138 = vsel %vm1137, %v1130, %v1134
        %v1139 = vand.u32 2147483647, %v1066
        %vm1140 = vcmp.eq.f32.partialorder %v1139, 8.507059e+37
        %v1141 = vand.u32 %v1066, 2147483648
        %v1142 = vor.u32 1.1754944e-38, %v1141
        %v1143 = vsel %vm1140, %v1142, %v1138
        %v1144 = vmul.f32 1.0, %v1143
        %v1145 = vrcp.pop %v1067
        %v1146 = vmul.f32 %v1067, %v1145
        %v1147 = vsub.f32 1.0, %v1146
        %v1148 = vmul.f32 %v1145, %v1147
        %v1149 = vadd.f32 %v1145, %v1148
        %vm1150 = vweird.f32 %v1067
        %vm1151 = vweird.f32 %v1145
        %vm1152 = vmor %vm1150, %vm1151
        %v1153 = vsel %vm1152, %v1145, %v1149
        %v1154 = vand.u32 2147483647, %v1067
        %vm1155 = vcmp.eq.f32.partialorder %v1154, 8.507059e+37
        %v1156 = vand.u32 %v1067, 2147483648
        %v1157 = vor.u32 1.1754944e-38, %v1156
        %v1158 = vsel %vm1155, %v1157, %v1153
        %v1159 = vmul.f32 1.0, %v1158
        %v1160 = vrcp.pop %v1068
        %v1161 = vmul.f32 %v1068, %v1160
        %v1162 = vsub.f32 1.0, %v1161
        %v1163 = vmul.f32 %v1160, %v1162
        %v1164 = vadd.f32 %v1160, %v1163
        %vm1165 = vweird.f32 %v1068
        %vm1166 = vweird.f32 %v1160
        %vm1167 = vmor %vm1165, %vm1166
        %v1168 = vsel %vm1167, %v1160, %v1164
        %v1169 = vand.u32 2147483647, %v1068
        %vm1170 = vcmp.eq.f32.partialorder %v1169, 8.507059e+37
        %v1171 = vand.u32 %v1068, 2147483648
        %v1172 = vor.u32 1.1754944e-38, %v1171
        %v1173 = vsel %vm1170, %v1172, %v1168
        %v1174 = vmul.f32 1.0, %v1173
        %v1175 = vrcp.pop %v1069
        %v1176 = vmul.f32 %v1069, %v1175
        %v1177 = vsub.f32 1.0, %v1176
        %v1178 = vmul.f32 %v1175, %v1177
        %v1179 = vadd.f32 %v1175, %v1178
        %vm1180 = vweird.f32 %v1069
        %vm1181 = vweird.f32 %v1175
        %vm1182 = vmor %vm1180, %vm1181
        %v1183 = vsel %vm1182, %v1175, %v1179
        %v1184 = vand.u32 2147483647, %v1069
        %vm1185 = vcmp.eq.f32.partialorder %v1184, 8.507059e+37
        %v1186 = vand.u32 %v1069, 2147483648
        %v1187 = vor.u32 1.1754944e-38, %v1186
        %v1188 = vsel %vm1185, %v1187, %v1183
        %v1189 = vmul.f32 1.0, %v1188
        %vm1190 = vcmask 7168
        %1191 = vst.msk [vmem:[%s267] sm:$0xff] %vm1190, %v1084
        %1192 = vst.msk [vmem:[%s267 + $0x8] sm:$0xff] %vm1190, %v1099
        %1193 = vst.msk [vmem:[%s267 + $0x10] sm:$0xff] %vm1190, %v1114
        %1194 = vst.msk [vmem:[%s267 + $0x18] sm:$0xff] %vm1190, %v1129
        %1195 = vst.msk [vmem:[%s267 + $0x20] sm:$0xff] %vm1190, %v1144
        %1196 = vst.msk [vmem:[%s267 + $0x28] sm:$0xff] %vm1190, %v1159
        %1197 = vst.msk [vmem:[%s267 + $0x30] sm:$0xff] %vm1190, %v1174
        %1198 = vst.msk [vmem:[%s267 + $0x38] sm:$0xff] %vm1190, %v1189
        %s1199 = sand.u32 %s139, 1
        %s1200 = sand.u32 %s139, 1
        %s1201 = smul.addr %s1200, 64
        %s1202 = scalar_lea.vmem [#allocation7], %s1201
        // Predicated region
        $region49: #{tpu_custom_call.1} parent=39 // pred_check
          %p1203 = pneg %p149
        $region50: #{tpu_custom_call.1} parent=39 // pred_check_branch
          %1205 = sbr.rel (%p1203) target = $region52
        $region51: #{tpu_custom_call.1} parent=39 // pred_region
          %s1206 = smul.u32 8, %s21
          %s1207 = ssub.s32 25, %s1206
          %p1208 = scmp.lt.s32.totalorder %s1207, 8
          %s1209 = scalar_select %p1208, %s1207, 8
          %s1210 = smul.u32 8, %s1209
          %p1211 = scmp.ne.s32.totalorder 0, %s1210
          %s1212 = smul.addr %s1206, 8
          %s1213 = scalar_lea.vmem %s5, %s1212
          // Predicated region
          $region53: #{tpu_custom_call.1} parent=51 // pred_check
            %p1214 = pneg %p1211
          $region54: #{tpu_custom_call.1} parent=51 // pred_check_branch
            %1216 = sbr.rel (%p1214) target = $region56
          $region55: #{tpu_custom_call.1} parent=51 // pred_region
            // Predicated region
            $region57: #{tpu_custom_call.1} parent=55 // pred_check
              _
            $region58: #{tpu_custom_call.1} parent=55 // pred_check_branch
              %1218 = sbr.rel (0) target = $region60
            $region59: #{tpu_custom_call.1} parent=55 // pred_region
              // Predicated region
              $region79: #{tpu_custom_call.1} parent=59 // pred_check
                _
              $region80: #{tpu_custom_call.1} parent=59 // pred_check_branch
                %1282 = sbr.rel (0) target = $region82
              $region81: #{tpu_custom_call.1} parent=59 // pred_region
                %s1283 = sshrl.u32 %s1209, 3
                // While loop
                $region83: #{tpu_custom_call.1} parent=81 // loop_pre_header
                  _
                $region84: #{tpu_custom_call.1} parent=81 // loop_header
                  %s1285 = sphi 0, %s1287
                  %p1286 = scmp.ge.s32.totalorder %s1285, %s1283
                  %s1290 = sphi 0, %s1311
                  %s1291 = sphi %s1202, %s1314
                  %s1292 = sphi %s1213, %s1315
                $region85: #{tpu_custom_call.1} parent=81 // loop_header_branch
                  %1289 = sbr.rel (%p1286) target = $region89
                $region86: #{tpu_custom_call.1} parent=81 // loop_body
                  %v1293 = vld [vmem:[%s1291] sm:$0xff]
                  %1294 = vst [vmem:[%s1292] sm:$0xff] %v1293
                  %v1295 = vld [vmem:[%s1291 + $0x8] sm:$0xff]
                  %1296 = vst [vmem:[%s1292 + $0x8] sm:$0xff] %v1295
                  %v1297 = vld [vmem:[%s1291 + $0x10] sm:$0xff]
                  %1298 = vst [vmem:[%s1292 + $0x10] sm:$0xff] %v1297
                  %v1299 = vld [vmem:[%s1291 + $0x18] sm:$0xff]
                  %1300 = vst [vmem:[%s1292 + $0x18] sm:$0xff] %v1299
                  %v1301 = vld [vmem:[%s1291 + $0x20] sm:$0xff]
                  %1302 = vst [vmem:[%s1292 + $0x20] sm:$0xff] %v1301
                  %v1303 = vld [vmem:[%s1291 + $0x28] sm:$0xff]
                  %1304 = vst [vmem:[%s1292 + $0x28] sm:$0xff] %v1303
                  %v1305 = vld [vmem:[%s1291 + $0x30] sm:$0xff]
                  %1306 = vst [vmem:[%s1292 + $0x30] sm:$0xff] %v1305
                  %v1307 = vld [vmem:[%s1291 + $0x38] sm:$0xff]
                  %1308 = vst [vmem:[%s1292 + $0x38] sm:$0xff] %v1307
                  %s1309 = sadd.s32 1, %s1290
                  %p1310 = scmp.ge.s32.totalorder %s1309, %s1283
                  %s1311 = scalar_select %p1310, 0, %s1309
                  %s1312 = smul.u32 %s1311, 64
                  %s1313 = smul.u32 %s1311, 64
                  %s1314 = scalar_lea.vmem %s1202, %s1312 [#allocation7]
                  %s1315 = scalar_lea.vmem %s1213, %s1313
                $region87: #{tpu_custom_call.1} parent=81 // loop_footer
                  %s1287 = sadd.s32 %s1285, 1
                $region88: #{tpu_custom_call.1} parent=81 // loop_footer_branch
                  %1284 = sbr.rel target = $region84
                $region89: #{tpu_custom_call.1} parent=81 // loop_exit
                  _
                %s1316 = sshrl.u32 %s1209, 3
                %s1317 = sand.u32 %s1209, 7
                %s1318 = smul.u32 %s1316, 8
                %s1319 = smul.u32 8, %s1318
                %s1320 = scalar_lea.vmem %s1202, %s1319 [#allocation7]
                %s1321 = smul.u32 8, %s1318
                %s1322 = scalar_lea.vmem %s1213, %s1321
                // While loop
                $region90: #{tpu_custom_call.1} parent=81 // loop_pre_header
                  _
                $region91: #{tpu_custom_call.1} parent=81 // loop_header
                  %s1324 = sphi 0, %s1326
                  %p1325 = scmp.ge.s32.totalorder %s1324, %s1317
                  %s1329 = sphi 0, %s1336
                  %s1330 = sphi %s1320, %s1339
                  %s1331 = sphi %s1322, %s1340
                $region92: #{tpu_custom_call.1} parent=81 // loop_header_branch
                  %1328 = sbr.rel (%p1325) target = $region96
                $region93: #{tpu_custom_call.1} parent=81 // loop_body
                  %v1332 = vld [vmem:[%s1330] sm:$0xff]
                  %1333 = vst [vmem:[%s1331] sm:$0xff] %v1332
                  %s1334 = sadd.s32 1, %s1329
                  %p1335 = scmp.ge.s32.totalorder %s1334, %s1317
                  %s1336 = scalar_select %p1335, 0, %s1334
                  %s1337 = smul.u32 %s1336, 8
                  %s1338 = smul.u32 %s1336, 8
                  %s1339 = scalar_lea.vmem %s1320, %s1337 [#allocation7]
                  %s1340 = scalar_lea.vmem %s1322, %s1338
                $region94: #{tpu_custom_call.1} parent=81 // loop_footer
                  %s1326 = sadd.s32 %s1324, 1
                $region95: #{tpu_custom_call.1} parent=81 // loop_footer_branch
                  %1323 = sbr.rel target = $region91
                $region96: #{tpu_custom_call.1} parent=81 // loop_exit
                  _
              $region82: #{tpu_custom_call.1} parent=59 // pred_fallthru
                _
              // Predicated region
              $region97: #{tpu_custom_call.1} parent=59 // pred_check
                _
              $region98: #{tpu_custom_call.1} parent=59 // pred_check_branch
                %1342 = sbr.rel target = $region100
              $region99: #{tpu_custom_call.1} parent=59 // pred_region
                _
              $region100: #{tpu_custom_call.1} parent=59 // pred_fallthru
                _
            $region60: #{tpu_custom_call.1} parent=55 // pred_fallthru
              _
            // Predicated region
            $region61: #{tpu_custom_call.1} parent=55 // pred_check
              _
            $region62: #{tpu_custom_call.1} parent=55 // pred_check_branch
              %1220 = sbr.rel target = $region64
            $region63: #{tpu_custom_call.1} parent=55 // pred_region
              %s1222 = ssub.s32 256, 1
              %s1223 = sshrl.u32 %s1209, 3
              // While loop
              $region65: #{tpu_custom_call.1} parent=63 // loop_pre_header
                _
              $region66: #{tpu_custom_call.1} parent=63 // loop_header
                %s1225 = sphi 0, %s1227
                %p1226 = scmp.ge.s32.totalorder %s1225, %s1223
                %s1230 = sphi 0, %s1251
                %s1231 = sphi %s1202, %s1254
                %s1232 = sphi %s1213, %s1255
              $region67: #{tpu_custom_call.1} parent=63 // loop_header_branch
                %1229 = sbr.rel (%p1226) target = $region71
              $region68: #{tpu_custom_call.1} parent=63 // loop_body
                %v1233 = vld [vmem:[%s1231] sm:%s1222]
                %1234 = vst [vmem:[%s1232] sm:%s1222] %v1233
                %v1235 = vld [vmem:[%s1231 + $0x8] sm:%s1222]
                %1236 = vst [vmem:[%s1232 + $0x8] sm:%s1222] %v1235
                %v1237 = vld [vmem:[%s1231 + $0x10] sm:%s1222]
                %1238 = vst [vmem:[%s1232 + $0x10] sm:%s1222] %v1237
                %v1239 = vld [vmem:[%s1231 + $0x18] sm:%s1222]
                %1240 = vst [vmem:[%s1232 + $0x18] sm:%s1222] %v1239
                %v1241 = vld [vmem:[%s1231 + $0x20] sm:%s1222]
                %1242 = vst [vmem:[%s1232 + $0x20] sm:%s1222] %v1241
                %v1243 = vld [vmem:[%s1231 + $0x28] sm:%s1222]
                %1244 = vst [vmem:[%s1232 + $0x28] sm:%s1222] %v1243
                %v1245 = vld [vmem:[%s1231 + $0x30] sm:%s1222]
                %1246 = vst [vmem:[%s1232 + $0x30] sm:%s1222] %v1245
                %v1247 = vld [vmem:[%s1231 + $0x38] sm:%s1222]
                %1248 = vst [vmem:[%s1232 + $0x38] sm:%s1222] %v1247
                %s1249 = sadd.s32 1, %s1230
                %p1250 = scmp.ge.s32.totalorder %s1249, %s1223
                %s1251 = scalar_select %p1250, 0, %s1249
                %s1252 = smul.u32 %s1251, 64
                %s1253 = smul.u32 %s1251, 64
                %s1254 = scalar_lea.vmem %s1202, %s1252 [#allocation7]
                %s1255 = scalar_lea.vmem %s1213, %s1253
              $region69: #{tpu_custom_call.1} parent=63 // loop_footer
                %s1227 = sadd.s32 %s1225, 1
              $region70: #{tpu_custom_call.1} parent=63 // loop_footer_branch
                %1224 = sbr.rel target = $region66
              $region71: #{tpu_custom_call.1} parent=63 // loop_exit
                _
              %s1256 = sshrl.u32 %s1209, 3
              %s1257 = sand.u32 %s1209, 7
              %s1258 = smul.u32 %s1256, 8
              %s1259 = smul.u32 8, %s1258
              %s1260 = scalar_lea.vmem %s1202, %s1259 [#allocation7]
              %s1261 = smul.u32 8, %s1258
              %s1262 = scalar_lea.vmem %s1213, %s1261
              // While loop
              $region72: #{tpu_custom_call.1} parent=63 // loop_pre_header
                _
              $region73: #{tpu_custom_call.1} parent=63 // loop_header
                %s1264 = sphi 0, %s1266
                %p1265 = scmp.ge.s32.totalorder %s1264, %s1257
                %s1269 = sphi 0, %s1276
                %s1270 = sphi %s1260, %s1279
                %s1271 = sphi %s1262, %s1280
              $region74: #{tpu_custom_call.1} parent=63 // loop_header_branch
                %1268 = sbr.rel (%p1265) target = $region78
              $region75: #{tpu_custom_call.1} parent=63 // loop_body
                %v1272 = vld [vmem:[%s1270] sm:%s1222]
                %1273 = vst [vmem:[%s1271] sm:%s1222] %v1272
                %s1274 = sadd.s32 1, %s1269
                %p1275 = scmp.ge.s32.totalorder %s1274, %s1257
                %s1276 = scalar_select %p1275, 0, %s1274
                %s1277 = smul.u32 %s1276, 8
                %s1278 = smul.u32 %s1276, 8
                %s1279 = scalar_lea.vmem %s1260, %s1277 [#allocation7]
                %s1280 = scalar_lea.vmem %s1262, %s1278
              $region76: #{tpu_custom_call.1} parent=63 // loop_footer
                %s1266 = sadd.s32 %s1264, 1
              $region77: #{tpu_custom_call.1} parent=63 // loop_footer_branch
                %1263 = sbr.rel target = $region73
              $region78: #{tpu_custom_call.1} parent=63 // loop_exit
                _
            $region64: #{tpu_custom_call.1} parent=55 // pred_fallthru
              _
          $region56: #{tpu_custom_call.1} parent=51 // pred_fallthru
            _
          %1343 = vnop
        $region52: #{tpu_custom_call.1} parent=39 // pred_fallthru
          _
      $region40: #{tpu_custom_call.1} parent=5 // pred_fallthru
        _
      %p1344 = scmp.le.s32.totalorder 2, %s16
      // Predicated region
      $region101: #{tpu_custom_call.1} parent=5 // pred_check
        %p1345 = pneg %p1344
      $region102: #{tpu_custom_call.1} parent=5 // pred_check_branch
        %1347 = sbr.rel (%p1345) target = $region104
      $region103: #{tpu_custom_call.1} parent=5 // pred_region
        %s1348 = ssub.s32 %s16, 2
        // Predicated region
        $region105: #{tpu_custom_call.1} parent=103 // pred_check
          %p1349 = pneg %p155
        $region106: #{tpu_custom_call.1} parent=103 // pred_check_branch
          %1351 = sbr.rel (%p1349) target = $region108
        $region107: #{tpu_custom_call.1} parent=103 // pred_region
          %s1352 = sand.u32 %s140, 1
          %s1353 = sand.u32 %s140, 1
          %s1354 = smul.addr %s1353, 64
          %s1355 = scalar_lea.vmem [#allocation7], %s1354
        $region108: #{tpu_custom_call.1} parent=103 // pred_fallthru
          _
      $region104: #{tpu_custom_call.1} parent=5 // pred_fallthru
        _
    $region6: #{tpu_custom_call.1} parent=1 // loop_footer
      %s20 = sadd.s32 1, %s16
    $region7: #{tpu_custom_call.1} parent=1 // loop_footer_branch
      %15 = sbr.rel target = $region3
    $region8: #{tpu_custom_call.1} parent=1 // loop_exit
      _
    %1356 = vsyncpa [#allocation4], 1
    %s1357 = scalar_lea.sflag [#allocation4], 1
    %1358 = vsyncpa %s1357, 1
    %1359 = vsyncpa [#allocation6], 1

</llo_original>
